<compile_context>
chip_gen: v5e
topology: v5e:2x2
jax: 0.10.0
libtpu: 0.0.40
codegen_flags: <defaults>
</compile_context>

<pallas_src>
from typing import NamedTuple, Tuple

import jax
import jax.numpy as jnp
from jax.experimental import pallas as pl
from jax.experimental.pallas import tpu as pltpu


# ----------------------------- Pallas kernels ------------------------------


def _cls_kernel(h_ref, out_ref):
    # h_ref: (TB, TS_cls, H) -- only a small seq prefix was fetched; take token 0.
    out_ref[...] = h_ref[:, 0, :]


def _masked_mean_kernel(mask_ref, h_ref, out_ref, num_acc, den_acc):
    # Grid: (B//TB, S//TS). s is the reduction axis (last, "arbitrary").
    s = pl.program_id(1)

    @pl.when(s == 0)
    def _init():
        num_acc[...] = jnp.zeros_like(num_acc)
        den_acc[...] = jnp.zeros_like(den_acc)

    h = h_ref[...]                                     # (TB, TS, H), native dtype
    mask = mask_ref[...]                               # (TB, TS)
    prod = h * mask.astype(h.dtype)[:, :, None]        # elementwise in native dtype
    num_acc[...] += jnp.sum(prod.astype(jnp.float32), axis=1)            # f32 acc
    den_acc[...] += jnp.sum(mask.astype(jnp.float32), axis=1, keepdims=True)

    @pl.when(s == pl.num_programs(1) - 1)
    def _finalize():
        # NOTE: like the PyTorch reference, an all-zero mask row yields inf/nan.
        inv = pl.reciprocal(den_acc[...], approx=False)
        out_ref[...] = (num_acc[...] * inv).astype(out_ref.dtype)


def _masked_mean2_kernel(mask_ref, ha_ref, hb_ref, out_ref, num_acc, den_acc):
    s = pl.program_id(1)

    @pl.when(s == 0)
    def _init():
        num_acc[...] = jnp.zeros_like(num_acc)
        den_acc[...] = jnp.zeros_like(den_acc)

    ha = ha_ref[...]                                   # (TB, TS, H)
    hb = hb_ref[...]                                   # (TB, TS, H)
    mask = mask_ref[...]                               # (TB, TS)
    prod = (ha + hb) * mask.astype(ha.dtype)[:, :, None]
    num_acc[...] += jnp.sum(prod.astype(jnp.float32), axis=1)
    den_acc[...] += jnp.sum(mask.astype(jnp.float32), axis=1, keepdims=True)

    @pl.when(s == pl.num_programs(1) - 1)
    def _finalize():
        inv = pl.reciprocal(den_acc[...], approx=False)
        # 0.5 implements (h_a + h_b) / 2 (applied once, after the reduction).
        out_ref[...] = (0.5 * num_acc[...] * inv).astype(out_ref.dtype)


# --------------------------- Tiling heuristics -------------------------------


def _pick_batch_tile(B: int) -> int:
    # TB is the sublane dim of the (TB, H) output block and the (TB, TS) mask
    # block -> must be a multiple of 8 or the full batch dim.
    for cand in (64, 32, 16, 8):
        if B % cand == 0:
            return cand
    return B


def _pick_seq_tile(S: int, TB: int, H: int, itemsize: int, n_h_inputs: int,
                   budget_bytes: int = 16 * 1024 * 1024) -> int:
    """Largest multiple-of-128 divisor of S whose double-buffered hidden-state
    tiles fit in the budget (keeps total VMEM well under the 32 MiB scoped
    limit, safe on v7x's 64 MiB physical VMEM).  Falls back to full S."""
    if S % 128 != 0:
        return S  # full-dim block is always layout-legal
    per_ts_row = TB * H * itemsize * 2 * n_h_inputs   # 2 = double buffering
    ts = 128
    for cand in range(128, S + 1, 128):
        if S % cand == 0 and cand * per_ts_row <= budget_bytes:
            ts = cand
    return ts


_VMEM_LIMIT = 32 * 1024 * 1024  # explicit scoped-VMEM limit, valid on v5e/v6e/v7x


# ------------------------------ JAX wrappers --------------------------------


def _cls_pool(last_hidden: jax.Array) -> jax.Array:
    B, S, H = last_hidden.shape
    TB = _pick_batch_tile(B)
    # Only need token 0; fetch an 8-token prefix (or full S if S is small /
    # not 8-aligned) to respect the (8,128) block-layout rule.  This is ~S/8x
    # less HBM traffic than moving the whole tensor.
    TS = 8 if (S >= 8 and S % 8 == 0) else S
    return pl.pallas_call(
        _cls_kernel,
        out_shape=jax.ShapeDtypeStruct((B, H), last_hidden.dtype),
        grid=(B // TB,),
        in_specs=[pl.BlockSpec((TB, TS, H), lambda b: (b, 0, 0))],
        out_specs=pl.BlockSpec((TB, H), lambda b: (b, 0)),
        compiler_params=pltpu.CompilerParams(
            dimension_semantics=("parallel",),
            vmem_limit_bytes=_VMEM_LIMIT,
        ),
    )(last_hidden)


def _avg_pool(attention_mask: jax.Array, last_hidden: jax.Array) -> jax.Array:
    B, S, H = last_hidden.shape
    TB = _pick_batch_tile(B)
    TS = _pick_seq_tile(S, TB, H, last_hidden.dtype.itemsize, n_h_inputs=1)
    return pl.pallas_call(
        _masked_mean_kernel,
        out_shape=jax.ShapeDtypeStruct((B, H), last_hidden.dtype),
        grid=(B // TB, S // TS),
        in_specs=[
            pl.BlockSpec((TB, TS), lambda b, s: (b, s)),        # mask
            pl.BlockSpec((TB, TS, H), lambda b, s: (b, s, 0)),  # hidden
        ],
        out_specs=pl.BlockSpec((TB, H), lambda b, s: (b, 0)),
        scratch_shapes=[
            pltpu.VMEM((TB, H), jnp.float32),   # numerator accumulator
            pltpu.VMEM((TB, 1), jnp.float32),   # denominator accumulator
        ],
        compiler_params=pltpu.CompilerParams(
            dimension_semantics=("parallel", "arbitrary"),
            vmem_limit_bytes=_VMEM_LIMIT,
        ),
    )(attention_mask, last_hidden)


def _avg2_pool(attention_mask: jax.Array, h_a: jax.Array, h_b: jax.Array) -> jax.Array:
    B, S, H = h_a.shape
    TB = _pick_batch_tile(B)
    TS = _pick_seq_tile(S, TB, H, h_a.dtype.itemsize, n_h_inputs=2)
    return pl.pallas_call(
        _masked_mean2_kernel,
        out_shape=jax.ShapeDtypeStruct((B, H), h_a.dtype),
        grid=(B // TB, S // TS),
        in_specs=[
            pl.BlockSpec((TB, TS), lambda b, s: (b, s)),        # mask
            pl.BlockSpec((TB, TS, H), lambda b, s: (b, s, 0)),  # hidden a
            pl.BlockSpec((TB, TS, H), lambda b, s: (b, s, 0)),  # hidden b
        ],
        out_specs=pl.BlockSpec((TB, H), lambda b, s: (b, 0)),
        scratch_shapes=[
            pltpu.VMEM((TB, H), jnp.float32),
            pltpu.VMEM((TB, 1), jnp.float32),
        ],
        compiler_params=pltpu.CompilerParams(
            dimension_semantics=("parallel", "arbitrary"),
            vmem_limit_bytes=_VMEM_LIMIT,
        ),
    )(attention_mask, h_a, h_b)


# --------------------------- Module-level wrapper ----------------------------


class ModelOutputs(NamedTuple):
    last_hidden_state: jax.Array                 # (B, S, H)
    pooler_output: jax.Array                     # (B, H)   (unused, mirrors HF output)
    hidden_states: Tuple[jax.Array, ...]         # L+1 arrays of (B, S, H)


class Pooler:
    """JAX/Pallas port of the SimCSE Pooler module (parameter-free)."""

    def __init__(self, pooler_type: str):
        assert pooler_type in [
            "cls", "cls_before_pooler", "avg", "avg_top2", "avg_first_last"
        ], "unrecognized pooling type %s" % pooler_type
        self.pooler_type = pooler_type

    def __call__(self, attention_mask: jax.Array, outputs: ModelOutputs) -> jax.Array:
        last_hidden = outputs.last_hidden_state
        hidden_states = outputs.hidden_states
        if self.pooler_type in ["cls_before_pooler", "cls"]:
            return _cls_pool(last_hidden)
        elif self.pooler_type == "avg":
            return _avg_pool(attention_mask, last_hidden)
        elif self.pooler_type == "avg_first_last":
            return _avg2_pool(attention_mask, hidden_states[0], hidden_states[-1])
        elif self.pooler_type == "avg_top2":
            return _avg2_pool(attention_mask, hidden_states[-2], hidden_states[-1])
        else:
            raise NotImplementedError


# ------------------------------ Reference (pure JAX) -------------------------


def _reference(pooler_type, attention_mask, outputs: ModelOutputs):
    last_hidden = outputs.last_hidden_state
    hidden_states = outputs.hidden_states
    m = attention_mask.astype(jnp.float32)
    if pooler_type in ["cls_before_pooler", "cls"]:
        return last_hidden[:, 0]
    elif pooler_type == "avg":
        return (last_hidden * m[:, :, None]).sum(1) / m.sum(-1)[:, None]
    elif pooler_type == "avg_first_last":
        h = (hidden_states[0] + hidden_states[-1]) / 2.0
        return (h * m[:, :, None]).sum(1) / m.sum(-1)[:, None]
    elif pooler_type == "avg_top2":
        h = (hidden_states[-2] + hidden_states[-1]) / 2.0
        return (h * m[:, :, None]).sum(1) / m.sum(-1)[:, None]


# ----------------------------------- main ------------------------------------

if __name__ == "__main__":
    B, S, H, L = 2, 8, 32, 4  # batch, seq, hidden, num layers

    key = jax.random.PRNGKey(0)
    keys = jax.random.split(key, L + 3)

    # L+1 hidden states (embedding output + L layers), last one == last_hidden_state
    hidden_states = tuple(
        jax.random.normal(keys[i], (B, S, H), dtype=jnp.float32) for i in range(L + 1)
    )
    last_hidden = hidden_states[-1]
    pooler_output = jax.random.normal(keys[L + 1], (B, H), dtype=jnp.float32)

    # Attention mask: first row fully valid, second row half padded (like BERT)
    attention_mask = jnp.concatenate(
        [jnp.ones((1, S), dtype=jnp.float32),
         jnp.concatenate([jnp.ones((1, S // 2)), jnp.zeros((1, S // 2))],
                         axis=1).astype(jnp.float32)],
        axis=0,
    )

    outputs = ModelOutputs(
        last_hidden_state=last_hidden,
        pooler_output=pooler_output,
        hidden_states=hidden_states,
    )

    ok = True
    for ptype in ["cls", "cls_before_pooler", "avg", "avg_first_last", "avg_top2"]:
        pooler = Pooler(ptype)
        got = jax.block_until_ready(pooler(attention_mask, outputs))
        want = _reference(ptype, attention_mask, outputs)
        if got.shape != (B, H):
            ok = False
        if not jnp.allclose(got, want, atol=1e-5, rtol=1e-5):
            ok = False

    if ok:
        print("KERNEL_OK")
    else:
        print("KERNEL_MISMATCH")
</pallas_src>

<mosaic_0001>
module attributes {stable_mosaic.version = 11 : i64} {
  func.func @_cls_kernel(%arg0: i32, %arg1: memref<2x8x32xf32, #tpu.memory_space<vmem>>, %arg2: memref<2x32xf32, #tpu.memory_space<vmem>>) attributes {dimension_semantics = [#tpu.dimension_semantics<parallel>], iteration_bounds = array<i64: 1>, scalar_prefetch = 0 : i64, scratch_operands = 0 : i64, tpu.core_type = #tpu.core_type<tc>, window_params = [{transform_indices = @transform_0, window_bounds = array<i64: 2, 8, 32>}, {transform_indices = @transform_1, window_bounds = array<i64: 2, 32>}]} {
    %c0 = arith.constant 0 : index
    %c0_0 = arith.constant 0 : index
    %c0_1 = arith.constant 0 : index
    %0 = vector.load %arg1[%c0, %c0_0, %c0_1] : memref<2x8x32xf32, #tpu.memory_space<vmem>>, vector<2x1x32xf32>
    %1 = vector.shape_cast %0 : vector<2x1x32xf32> to vector<2x32xf32>
    %c0_2 = arith.constant 0 : index
    %c0_3 = arith.constant 0 : index
    %2 = vector.load %arg2[%c0_2, %c0_3] : memref<2x32xf32, #tpu.memory_space<vmem>>, vector<2x32xf32>
    tpu.vector_store %arg2[%c0_2, %c0_3], %1 {strides = array<i32>} : memref<2x32xf32, #tpu.memory_space<vmem>>, vector<2x32xf32>,
    return
  }
  func.func @transform_0(%arg0: i32) -> (i32, i32, i32) {
    %c0_i32 = arith.constant 0 : i32
    %c0_i32_0 = arith.constant 0 : i32
    %c0_i32_1 = arith.constant 0 : i32
    return %arg0, %c0_i32, %c0_i32_0 : i32, i32, i32
  }
  func.func @transform_1(%arg0: i32) -> (i32, i32) {
    %c0_i32 = arith.constant 0 : i32
    %c0_i32_0 = arith.constant 0 : i32
    return %arg0, %c0_i32 : i32, i32
  }
}

</mosaic_0001>

<llo_original>
// kernel: tpu_custom_call.1
$region0: #{tpu_custom_call.1}
  #allocation0 [shape = 'u32[]', space=smem, size = 0x4, offset = 0x4, fixed_abs, tag = 'smem constant byte address 0x4 - core index']
  #allocation1 [shape = 'u32[72,128]{1,0:T(1,128)}', space=vmem, size = 0x9000, scoped, tag = 'internal scratch']
  %s0 = inlined_call_operand.hbm [shape: f32[2,8,32], index: 0, kind: input, shape index: {}]
  %s1 = inlined_call_operand.hbm [shape: f32[2,32], index: 1, kind: output, shape index: {}]
  %s2 = sld [smem:[#allocation0]]
  $region18: #{tpu_custom_call.1} parent=0
    _
  %s4 = ssub.s32 1, %s2
  %s5 = scalar_select 0, %s4, %s2
  $region1: #{tpu_custom_call.1} parent=0
    #allocation2 [shape = 'u8[8192]{0}', space=vmem, size = 0x2000, scoped, tag = 'input window, operand 0, single buffered']
    #allocation3 [shape = 's32[1]{0}', space=sflag, size = 0x4, scoped, tag = 'scoped memory for tpu_custom_call.1']
    #allocation4 [shape = 's32[1]{0}', space=sflag, size = 0x4, scoped, tag = 'scoped memory for tpu_custom_call.1']
    #allocation5 [shape = 'u8[1024]{0}', space=vmem, size = 0x400, scoped, tag = 'output window, operand 0, single buffered']
    %6 = vsyncpa [#allocation3], 0
    %7 = vsyncpa [#allocation4], 0
    // Predicated region
    $region2: #{tpu_custom_call.1} parent=1 // pred_check
      _
    $region3: #{tpu_custom_call.1} parent=1 // pred_check_branch
      %9 = sbr.rel (0) target = $region5
    $region4: #{tpu_custom_call.1} parent=1 // pred_region
      %11 = vsyncadd [#allocation3], 0
      %s12 = sshll.u32 %s0, 4
      %s13 = int_to_ptr.hbm [resolvable:$true] %s12
      %s14 = sshll.u32 [#allocation2], 4
      %s15 = int_to_ptr.vmem [resolvable:$true] %s14
      %20 = dma.hbm_to_vmem [thread:$0]  %s13, 256, %s15, [#allocation3], 128, 128, 8
    $region5: #{tpu_custom_call.1} parent=1 // pred_fallthru
      _
    // Predicated region
    $region6: #{tpu_custom_call.1} parent=1 // pred_check
      _
    $region7: #{tpu_custom_call.1} parent=1 // pred_check_branch
      %22 = sbr.rel (0) target = $region9
    $region8: #{tpu_custom_call.1} parent=1 // pred_region
      %24 = dma.done [#allocation3], 256
    $region9: #{tpu_custom_call.1} parent=1 // pred_fallthru
      _
    %v25 = vld [vmem:[#allocation2] sm:$0x1]
    %v26 = vld [vmem:[#allocation2 + $0x8] sm:$0x1]
    %v29 = vrot.slane %v26, 7
    %vm30 = vcmask 1041409
    %v31 = vsel %vm30, %v29, %v25
    %vm33 = vcmask 254976
    %34 = vst.msk [vmem:[#allocation5] sm:$0x3] %vm33, %v31
    // Predicated region
    $region10: #{tpu_custom_call.1} parent=1 // pred_check
      _
    $region11: #{tpu_custom_call.1} parent=1 // pred_check_branch
      %36 = sbr.rel (0) target = $region13
    $region12: #{tpu_custom_call.1} parent=1 // pred_region
      %38 = vsyncadd [#allocation4], 0
      %s40 = sshll.u32 [#allocation5], 4
      %s41 = int_to_ptr.vmem [resolvable:$true] %s40
      %s42 = sshll.u32 %s1, 4
      %s43 = int_to_ptr.hbm [resolvable:$true] %s42
      %45 = dma.vmem_to_hbm [thread:$0]  %s41, 32, %s43, [#allocation4]
    $region13: #{tpu_custom_call.1} parent=1 // pred_fallthru
      _
    // Predicated region
    $region14: #{tpu_custom_call.1} parent=1 // pred_check
      _
    $region15: #{tpu_custom_call.1} parent=1 // pred_check_branch
      %47 = sbr.rel (0) target = $region17
    $region16: #{tpu_custom_call.1} parent=1 // pred_region
      %49 = dma.done [#allocation4], 32
    $region17: #{tpu_custom_call.1} parent=1 // pred_fallthru
      _
    %50 = vsyncpa [#allocation3], 1
    %51 = vsyncpa [#allocation4], 1

</llo_original>
